<compile_context>
chip_gen: v6e
topology: v6e:2x2x1
jax: 0.10.0
libtpu: 0.0.40
codegen_flags: <defaults>
</compile_context>

<pallas_src>
import math
import functools

import jax
import jax.numpy as jnp
from jax.experimental import pallas as pl
from jax.experimental.pallas import tpu as pltpu


# Finite additive mask value (avoids -inf/NaN hazards in the online softmax while still
# underflowing to exactly 0 probability after exp for partially-masked rows).
_MASK_VALUE = -0.7 * float(jnp.finfo(jnp.float32).max)


@functools.lru_cache(maxsize=1)
def _vmem_limit_bytes():
    """~75% of per-core VMEM: leaves headroom for Mosaic internal scratch and the
    double-buffered BlockSpec inputs (48 MiB on v7x, 96 MiB on v5e/v6e)."""
    try:
        cap = int(pltpu.get_tpu_info().vmem_capacity_bytes)
    except Exception:
        cap = 64 * 1024 * 1024  # conservative (v7x-sized) fallback
    return int(cap * 3 // 4)


def _compiler_params(dimension_semantics):
    return pltpu.CompilerParams(
        dimension_semantics=dimension_semantics,
        vmem_limit_bytes=_vmem_limit_bytes(),
    )


def _pick_tile(dim, candidates):
    """Largest candidate that exactly divides dim, else the full dim (no padding needed)."""
    for c in candidates:
        if c <= dim and dim % c == 0:
            return c
    return dim


def _swap_leading(x):
    """[a, b, d] -> [b, a, d] on a VMEM tile (minor dim untouched, no HBM traffic)."""
    if hasattr(pltpu, "einshape"):
        return pltpu.einshape("abd->bad", x)
    return jnp.transpose(x, (1, 0, 2))


# ----------------------------------------------------------------------------
# Kernels 1 & 3: tiled matmul + bias (+ optional residual) with fp32 accumulator
# ----------------------------------------------------------------------------
def _matmul_bias_kernel(x_ref, w_ref, b_ref, o_ref, acc_ref):
    @pl.when(pl.program_id(2) == 0)
    def _init():
        acc_ref[...] = jnp.zeros_like(acc_ref)

    acc_ref[...] += jnp.dot(
        x_ref[...].astype(jnp.bfloat16),
        w_ref[...].astype(jnp.bfloat16),
        preferred_element_type=jnp.float32,
    )

    @pl.when(pl.program_id(2) == pl.num_programs(2) - 1)
    def _store():
        o_ref[...] = (acc_ref[...] + b_ref[...]).astype(o_ref.dtype)


def _matmul_bias_residual_kernel(x_ref, w_ref, b_ref, r_ref, o_ref, acc_ref):
    @pl.when(pl.program_id(2) == 0)
    def _init():
        acc_ref[...] = jnp.zeros_like(acc_ref)

    acc_ref[...] += jnp.dot(
        x_ref[...].astype(jnp.bfloat16),
        w_ref[...].astype(jnp.bfloat16),
        preferred_element_type=jnp.float32,
    )

    @pl.when(pl.program_id(2) == pl.num_programs(2) - 1)
    def _store():
        o_ref[...] = (
            acc_ref[...] + b_ref[...] + r_ref[...].astype(jnp.float32)
        ).astype(o_ref.dtype)


def linear(x, w, b, *, out_dtype):
    # x: [M, K] (bf16), w: [K, N] (bf16), b: [N] (fp32)
    M, K = x.shape
    N = w.shape[1]
    tm = _pick_tile(M, (512, 256, 128, 64, 32, 16, 8))
    tn = _pick_tile(N, (1024, 512, 256, 128))  # wide tn: x(i,k) tile re-streamed fewer times
    tk = _pick_tile(K, (512, 256, 128))
    return pl.pallas_call(
        _matmul_bias_kernel,
        out_shape=jax.ShapeDtypeStruct((M, N), out_dtype),
        grid=(M // tm, N // tn, K // tk),
        in_specs=[
            pl.BlockSpec((tm, tk), lambda i, j, k: (i, k)),
            pl.BlockSpec((tk, tn), lambda i, j, k: (k, j)),
            pl.BlockSpec((1, tn), lambda i, j, k: (0, j)),
        ],
        out_specs=pl.BlockSpec((tm, tn), lambda i, j, k: (i, j)),
        scratch_shapes=[pltpu.VMEM((tm, tn), jnp.float32)],
        compiler_params=_compiler_params(("parallel", "parallel", "arbitrary")),
    )(x, w, b.reshape(1, N))


def dense_residual(x, w, b, residual):
    # x: [M, K] (bf16), w: [K, N] (bf16), b: [N] (fp32), residual: [M, N] (fp32)
    M, K = x.shape
    N = w.shape[1]
    tm = _pick_tile(M, (512, 256, 128, 64, 32, 16, 8))
    tn = _pick_tile(N, (1024, 512, 256, 128))
    tk = _pick_tile(K, (512, 256, 128))
    return pl.pallas_call(
        _matmul_bias_residual_kernel,
        out_shape=jax.ShapeDtypeStruct((M, N), residual.dtype),
        grid=(M // tm, N // tn, K // tk),
        in_specs=[
            pl.BlockSpec((tm, tk), lambda i, j, k: (i, k)),
            pl.BlockSpec((tk, tn), lambda i, j, k: (k, j)),
            pl.BlockSpec((1, tn), lambda i, j, k: (0, j)),
            pl.BlockSpec((tm, tn), lambda i, j, k: (i, j)),
        ],
        out_specs=pl.BlockSpec((tm, tn), lambda i, j, k: (i, j)),
        scratch_shapes=[pltpu.VMEM((tm, tn), jnp.float32)],
        input_output_aliases={3: 0},  # residual buffer is reused as the output buffer
        compiler_params=_compiler_params(("parallel", "parallel", "arbitrary")),
    )(x, w, b.reshape(1, N), residual)


# ----------------------------------------------------------------------------
# Kernel 2: flash-style attention core
#   grid (B, H/hb, S/tq, S/tkv); online softmax state in VMEM scratch.
# ----------------------------------------------------------------------------
def _attn_tiles(num_heads, seq, vmem_limit):
    # head block: multiple of 8 (sublane-legal second-to-last block dim) or all heads
    hb = 8 if num_heads % 8 == 0 else num_heads
    # fp32 score/exp temporaries (~2 copies of hb*tq*tkv) get ~1/4 of the VMEM budget
    budget = max(vmem_limit // 4, 2 * 1024 * 1024)
    tq = _pick_tile(seq, (256, 128, 64, 32, 16, 8))
    tkv = _pick_tile(seq, (512, 256, 128))  # last dim of alibi/kpad blocks: mult. of 128 or full
    while hb * tq * tkv * 8 > budget and tkv >= 256 and tkv % 256 == 0 and seq % (tkv // 2) == 0:
        tkv //= 2
    while hb * tq * tkv * 8 > budget and tq >= 32 and tq % 16 == 0 and seq % (tq // 2) == 0:
        tq //= 2
    return hb, tq, tkv


def _attn_kernel(q_ref, k_ref, v_ref, alibi_ref, kpad_ref, o_ref,
                 m_ref, l_ref, acc_ref, *, inv_norm):
    ki = pl.program_id(3)

    @pl.when(ki == 0)
    def _init():
        m_ref[...] = jnp.full_like(m_ref, _MASK_VALUE)
        l_ref[...] = jnp.zeros_like(l_ref)
        acc_ref[...] = jnp.zeros_like(acc_ref)

    # token-major bf16 blocks -> head-major [hb, ., d] tiles (in-VMEM relayout only)
    q = _swap_leading((q_ref[...] * inv_norm).astype(jnp.bfloat16))  # [hb, tq, d], pre-scaled
    k = _swap_leading(k_ref[...])                                    # [hb, tkv, d]
    v = _swap_leading(v_ref[...])                                    # [hb, tkv, d]

    # scores = alibi + (q / sqrt(d)) @ k^T      (beta = 1)
    s = jnp.einsum("hqd,hkd->hqk", q, k, preferred_element_type=jnp.float32)
    s = s + alibi_ref[...][:, None, :].astype(jnp.float32)

    # causal + key-padding mask as ONE additive [tq, tkv] bias shared across the head block
    tq, tkv = s.shape[1], s.shape[2]
    row = pl.program_id(2) * tq + jax.lax.broadcasted_iota(jnp.int32, (tq, tkv), 0)
    col = ki * tkv + jax.lax.broadcasted_iota(jnp.int32, (tq, tkv), 1)
    bias = jnp.where(col > row, _MASK_VALUE, 0.0) + kpad_ref[...]
    bias = jnp.maximum(bias, _MASK_VALUE)  # keep finite when causal & padding overlap
    s = s + bias[None, :, :]

    # online softmax (fp32 state in VMEM scratch); normalization deferred to the epilogue
    m_prev = m_ref[...]
    m_new = jnp.maximum(m_prev, jnp.max(s, axis=-1, keepdims=True))
    alpha = jnp.exp(m_prev - m_new)
    p = jnp.exp(s - m_new)
    l_ref[...] = alpha * l_ref[...] + jnp.sum(p, axis=-1, keepdims=True)
    acc_ref[...] = alpha * acc_ref[...] + jnp.einsum(
        "hqk,hkd->hqd", p.astype(jnp.bfloat16), v, preferred_element_type=jnp.float32
    )
    m_ref[...] = m_new

    @pl.when(ki == pl.num_programs(3) - 1)
    def _store():
        ctx = acc_ref[...] * pl.reciprocal(l_ref[...], approx=True)
        # write token-major [tq, hb, d] so the output is already in [B, S, H, d] layout
        o_ref[...] = _swap_leading(ctx.astype(o_ref.dtype))


def attention_core(qkv, alibi, kpad_bias, *, inv_norm):
    # qkv: [B, S, 3, H, d] bf16 (columns pre-permuted to (q,k,v)-major order)
    # alibi: [B, H, 1, S] fp32; kpad_bias: [B, 1, S] fp32 additive (-BIG where key is padded)
    B, S, _, H, d = qkv.shape
    hb, tq, tkv = _attn_tiles(H, S, _vmem_limit_bytes())
    grid = (B, H // hb, S // tq, S // tkv)

    q_spec = pl.BlockSpec((None, tq, None, hb, d), lambda b, h, qi, ki: (b, qi, 0, h, 0))
    k_spec = pl.BlockSpec((None, tkv, None, hb, d), lambda b, h, qi, ki: (b, ki, 1, h, 0))
    v_spec = pl.BlockSpec((None, tkv, None, hb, d), lambda b, h, qi, ki: (b, ki, 2, h, 0))
    alibi_spec = pl.BlockSpec((None, hb, None, tkv), lambda b, h, qi, ki: (b, h, 0, ki))
    kpad_spec = pl.BlockSpec((None, 1, tkv), lambda b, h, qi, ki: (b, 0, ki))
    out_spec = pl.BlockSpec((None, tq, hb, d), lambda b, h, qi, ki: (b, qi, h, 0))

    return pl.pallas_call(
        functools.partial(_attn_kernel, inv_norm=inv_norm),
        out_shape=jax.ShapeDtypeStruct((B, S, H, d), jnp.bfloat16),
        grid=grid,
        in_specs=[q_spec, k_spec, v_spec, alibi_spec, kpad_spec],
        out_specs=out_spec,
        scratch_shapes=[
            pltpu.VMEM((hb, tq, 1), jnp.float32),  # running max
            pltpu.VMEM((hb, tq, 1), jnp.float32),  # running sum
            pltpu.VMEM((hb, tq, d), jnp.float32),  # fp32 context accumulator
        ],
        compiler_params=_compiler_params(("parallel", "parallel", "parallel", "arbitrary")),
    )(qkv, qkv, qkv, alibi, kpad_bias)


# ----------------------------------------------------------------------------
# Parameter prep (one-time) + full forward (glue in plain JAX, hot paths in Pallas)
# ----------------------------------------------------------------------------
def prepare_params(params, *, num_heads):
    """Permute fused-QKV columns from Bloom's [H, (q,k,v), d] interleave to
    [(q,k,v), H, d] so the projection output is consumed directly by the attention
    BlockSpecs (no split_heads transpose); pre-cast weights to bf16 for the MXU."""
    hidden = params["w_qkv"].shape[0]
    head_dim = hidden // num_heads
    w_qkv = (
        params["w_qkv"].reshape(hidden, num_heads, 3, head_dim)
        .transpose(0, 2, 1, 3).reshape(hidden, 3 * hidden)
    )
    b_qkv = (
        params["b_qkv"].reshape(num_heads, 3, head_dim)
        .transpose(1, 0, 2).reshape(3 * hidden)
    )
    return {
        "w_qkv": w_qkv.astype(jnp.bfloat16),
        "b_qkv": b_qkv.astype(jnp.float32),
        "w_dense": params["w_dense"].astype(jnp.bfloat16),
        "b_dense": params["b_dense"].astype(jnp.float32),
    }


def bloom_parallel_attention_forward(
    hidden_states, residual, alibi, attention_mask, prep_params, *, num_heads
):
    # TODO(synk): layer_past / use_cache / head_mask / output_attentions paths are not
    #             implemented (the flash form never materializes the attention probs).
    B, S, hidden = hidden_states.shape
    head_dim = hidden // num_heads
    inv_norm = 1.0 / math.sqrt(head_dim)

    # 1) fused QKV projection (bf16 in / bf16 out, fp32 accumulate)
    x = hidden_states.reshape(B * S, hidden).astype(jnp.bfloat16)
    fused = linear(x, prep_params["w_qkv"], prep_params["b_qkv"], out_dtype=jnp.bfloat16)
    qkv = fused.reshape(B, S, 3, num_heads, head_dim)  # free view; no split_heads transpose

    # 2) per-(batch, head) alibi and per-batch key-padding bias.
    alibi_b = alibi.reshape(B, num_heads, 1, -1).astype(jnp.float32)
    if attention_mask.shape[0] == B * num_heads:
        mask_b = attention_mask.reshape(B, num_heads, S, -1)[:, 0]
    else:
        mask_b = attention_mask.reshape(B, S, -1)
    # Bloom builds its mask as (causal | key-padding); the causal part is regenerated
    # in-kernel, so only the key-padding component (= last query row) is streamed.
    # TODO(synk): arbitrary per-position masks would need a dense int8 mask stream instead.
    kpad = mask_b[:, -1, :].astype(jnp.float32)
    kpad_bias = jnp.where(kpad > 0, _MASK_VALUE, 0.0).reshape(B, 1, -1).astype(jnp.float32)

    # 3) flash attention; output already in [B, S, H, d] (merge_heads is a free reshape)
    ctx = attention_core(qkv, alibi_b, kpad_bias, inv_norm=inv_norm)
    ctx = ctx.reshape(B * S, hidden)

    # 4) dense projection + bias + residual add (residual buffer aliased to the output)
    out = dense_residual(
        ctx, prep_params["w_dense"], prep_params["b_dense"],
        residual.reshape(B * S, hidden).astype(jnp.float32),
    )
    # outputs = (output_tensor, present); present is None (use_cache=False)
    return out.reshape(B, S, hidden), None


# ----------------------------------------------------------------------------
# Pure-JAX reference (module-faithful layout; emulates bf16-operand / fp32-acc matmuls)
# ----------------------------------------------------------------------------
def reference_forward(hidden_states, residual, alibi, attention_mask, params, *, num_heads):
    bf16 = jnp.bfloat16
    B, S, hidden = hidden_states.shape
    head_dim = hidden // num_heads
    inv_norm = 1.0 / math.sqrt(head_dim)

    def mm(a, b):
        return jnp.dot(a.astype(bf16), b.astype(bf16), preferred_element_type=jnp.float32)

    fused = mm(hidden_states.reshape(B * S, hidden), params["w_qkv"]) + params["b_qkv"]
    fused = fused.reshape(B, S, num_heads, 3 * head_dim)
    q = fused[..., :head_dim].transpose(0, 2, 1, 3).reshape(B * num_heads, S, head_dim)
    k = fused[..., head_dim: 2 * head_dim].transpose(0, 2, 1, 3).reshape(
        B * num_heads, S, head_dim
    )
    v = fused[..., 2 * head_dim:].transpose(0, 2, 1, 3).reshape(
        B * num_heads, S, head_dim
    )
    scores = 1.0 * alibi + inv_norm * jnp.einsum(
        "bqd,bkd->bqk", q.astype(bf16), k.astype(bf16),
        preferred_element_type=jnp.float32,
    )
    scores = jnp.where(attention_mask > 0, jnp.finfo(jnp.float32).min, scores)
    probs = jax.nn.softmax(scores, axis=-1)
    ctx = jnp.einsum(
        "bqk,bkd->bqd", probs.astype(bf16), v.astype(bf16),
        preferred_element_type=jnp.float32,
    )
    ctx = (
        ctx.reshape(B, num_heads, S, head_dim)
        .transpose(0, 2, 1, 3)
        .reshape(B * S, hidden)
    )
    out = mm(ctx, params["w_dense"]) + params["b_dense"] + residual.reshape(B * S, hidden)
    return out.reshape(B, S, hidden)


def build_alibi(batch, num_heads, seq, dtype=jnp.float32):
    # Standard Bloom alibi slopes (num_heads is a power of two here).
    slopes = jnp.array(
        [2.0 ** (-8.0 * (i + 1) / num_heads) for i in range(num_heads)], dtype=dtype
    )  # [H]
    positions = jnp.arange(seq, dtype=dtype)  # [S]
    alibi = slopes[:, None] * positions[None, :]  # [H, S]
    alibi = jnp.broadcast_to(alibi[None, :, :], (batch, num_heads, seq))
    return alibi.reshape(batch * num_heads, 1, seq)


if __name__ == "__main__":
    # small shapes consistent with the module
    batch, seq, hidden_size, num_heads = 2, 8, 32, 4

    key = jax.random.PRNGKey(0)
    k_hs, k_res, k_wq, k_bq, k_wd, k_bd = jax.random.split(key, 6)

    hidden_states = jax.random.normal(k_hs, (batch, seq, hidden_size), jnp.float32)
    residual = jax.random.normal(k_res, (batch, seq, hidden_size), jnp.float32)

    # Parameters (PyTorch Linear weights are [out, in]; stored pre-transposed as [in, out])
    scale = 1.0 / math.sqrt(hidden_size)
    params = {
        "w_qkv": jax.random.normal(k_wq, (hidden_size, 3 * hidden_size), jnp.float32) * scale,
        "b_qkv": jax.random.normal(k_bq, (3 * hidden_size,), jnp.float32) * scale,
        "w_dense": jax.random.normal(k_wd, (hidden_size, hidden_size), jnp.float32) * scale,
        "b_dense": jax.random.normal(k_bd, (hidden_size,), jnp.float32) * scale,
    }

    # alibi: [B*H, 1, S]
    alibi = build_alibi(batch, num_heads, seq)

    # causal attention mask: 1.0 => masked, broadcast to [B*H, S, S] (module interface)
    causal = (jnp.arange(seq)[:, None] < jnp.arange(seq)[None, :]).astype(jnp.float32)
    attention_mask = jnp.broadcast_to(
        causal[None, :, :], (batch * num_heads, seq, seq)
    )

    # module-faithful pure-JAX reference (computed first; kernel path aliases a temp buffer)
    ref = reference_forward(
        hidden_states, residual, alibi, attention_mask, params, num_heads=num_heads
    )

    prep = prepare_params(params, num_heads=num_heads)
    out, present = bloom_parallel_attention_forward(
        hidden_states, residual, alibi, attention_mask, prep, num_heads=num_heads
    )
    out = jax.block_until_ready(out)

    assert out.shape == (batch, seq, hidden_size)
    assert present is None
    # bf16 activations at kernel boundaries + approx reciprocal => bf16-level tolerance
    assert jnp.allclose(out, ref, atol=3e-2, rtol=3e-2), "mismatch vs reference"

    print("KERNEL_OK")
</pallas_src>

<mosaic_0001>
module attributes {stable_mosaic.version = 11 : i64} {
  func.func @_matmul_bias_kernel(%arg0: i32, %arg1: i32, %arg2: i32, %arg3: memref<16x32xbf16, #tpu.memory_space<vmem>>, %arg4: memref<32x96xbf16, #tpu.memory_space<vmem>>, %arg5: memref<1x96xf32, #tpu.memory_space<vmem>>, %arg6: memref<16x96xbf16, #tpu.memory_space<vmem>>, %arg7: memref<16x96xf32, #tpu.memory_space<vmem>>) attributes {dimension_semantics = [#tpu.dimension_semantics<parallel>, #tpu.dimension_semantics<parallel>, #tpu.dimension_semantics<arbitrary>], iteration_bounds = array<i64: 1, 1, 1>, scalar_prefetch = 0 : i64, scratch_operands = 1 : i64, tpu.core_type = #tpu.core_type<tc>, window_params = [{transform_indices = @transform_0, window_bounds = array<i64: 16, 32>}, {transform_indices = @transform_1, window_bounds = array<i64: 32, 96>}, {transform_indices = @transform_2, window_bounds = array<i64: 1, 96>}, {transform_indices = @transform_3, window_bounds = array<i64: 16, 96>}]} {
    %c0_i32 = arith.constant 0 : i32
    %0 = arith.cmpi eq, %arg2, %c0_i32 : i32
    %1 = arith.extui %0 : i1 to i32
    %c0_i32_0 = arith.constant 0 : i32
    %2 = arith.cmpi ne, %1, %c0_i32_0 : i32
    scf.if %2 {
      %cst_10 = arith.constant 0.000000e+00 : f32
      %12 = vector.broadcast %cst_10 : f32 to vector<16x96xf32>
      %c0_11 = arith.constant 0 : index
      %c0_12 = arith.constant 0 : index
      %13 = vector.load %arg7[%c0_11, %c0_12] : memref<16x96xf32, #tpu.memory_space<vmem>>, vector<16x96xf32>
      tpu.vector_store %arg7[%c0_11, %c0_12], %12 {strides = array<i32>} : memref<16x96xf32, #tpu.memory_space<vmem>>, vector<16x96xf32>,
    } else {
    }
    %c0 = arith.constant 0 : index
    %c0_1 = arith.constant 0 : index
    %3 = vector.load %arg7[%c0, %c0_1] : memref<16x96xf32, #tpu.memory_space<vmem>>, vector<16x96xf32>
    %c0_2 = arith.constant 0 : index
    %c0_3 = arith.constant 0 : index
    %4 = vector.load %arg3[%c0_2, %c0_3] : memref<16x32xbf16, #tpu.memory_space<vmem>>, vector<16x32xbf16>
    %c0_4 = arith.constant 0 : index
    %c0_5 = arith.constant 0 : index
    %5 = vector.load %arg4[%c0_4, %c0_5] : memref<32x96xbf16, #tpu.memory_space<vmem>>, vector<32x96xbf16>
    %cst = arith.constant dense<0.000000e+00> : vector<16x96xf32>
    %6 = tpu.matmul %4, %5, %cst {dimension_numbers = #tpu.dot_dimension_numbers<[1], [0], [0], [1], [0, 0, 1, 1], [], []>} : vector<16x32xbf16>, vector<32x96xbf16>, vector<16x96xf32> -> vector<16x96xf32>
    %7 = arith.addf %3, %6 : vector<16x96xf32>
    %c0_6 = arith.constant 0 : index
    %c0_7 = arith.constant 0 : index
    %8 = vector.load %arg7[%c0_6, %c0_7] : memref<16x96xf32, #tpu.memory_space<vmem>>, vector<16x96xf32>
    tpu.vector_store %arg7[%c0_6, %c0_7], %7 {strides = array<i32>} : memref<16x96xf32, #tpu.memory_space<vmem>>, vector<16x96xf32>,
    %c0_i32_8 = arith.constant 0 : i32
    %9 = arith.cmpi eq, %arg2, %c0_i32_8 : i32
    %10 = arith.extui %9 : i1 to i32
    %c0_i32_9 = arith.constant 0 : i32
    %11 = arith.cmpi ne, %10, %c0_i32_9 : i32
    scf.if %11 {
      %c0_10 = arith.constant 0 : index
      %c0_11 = arith.constant 0 : index
      %12 = vector.load %arg7[%c0_10, %c0_11] : memref<16x96xf32, #tpu.memory_space<vmem>>, vector<16x96xf32>
      %c0_12 = arith.constant 0 : index
      %c0_13 = arith.constant 0 : index
      %13 = vector.load %arg5[%c0_12, %c0_13] : memref<1x96xf32, #tpu.memory_space<vmem>>, vector<1x96xf32>
      %14 = vector.broadcast %13 : vector<1x96xf32> to vector<16x96xf32>
      %15 = arith.addf %12, %14 : vector<16x96xf32>
      %16 = arith.truncf %15 : vector<16x96xf32> to vector<16x96xbf16>
      %c0_14 = arith.constant 0 : index
      %c0_15 = arith.constant 0 : index
      %17 = vector.load %arg6[%c0_14, %c0_15] : memref<16x96xbf16, #tpu.memory_space<vmem>>, vector<16x96xbf16>
      tpu.vector_store %arg6[%c0_14, %c0_15], %16 {strides = array<i32>} : memref<16x96xbf16, #tpu.memory_space<vmem>>, vector<16x96xbf16>,
    } else {
    }
    return
  }
  func.func @transform_0(%arg0: i32, %arg1: i32, %arg2: i32) -> (i32, i32) {
    %c0_i32 = arith.constant 0 : i32
    return %arg0, %arg2 : i32, i32
  }
  func.func @transform_1(%arg0: i32, %arg1: i32, %arg2: i32) -> (i32, i32) {
    %c0_i32 = arith.constant 0 : i32
    return %arg2, %arg1 : i32, i32
  }
  func.func @transform_2(%arg0: i32, %arg1: i32, %arg2: i32) -> (i32, i32) {
    %c0_i32 = arith.constant 0 : i32
    %c0_i32_0 = arith.constant 0 : i32
    return %c0_i32, %arg1 : i32, i32
  }
  func.func @transform_3(%arg0: i32, %arg1: i32, %arg2: i32) -> (i32, i32) {
    %c0_i32 = arith.constant 0 : i32
    return %arg0, %arg1 : i32, i32
  }
}

</mosaic_0001>

<llo_original>
// kernel: tpu_custom_call.1
$region0: #{tpu_custom_call.1}
  #allocation0 [shape = 'u32[]', space=smem, size = 0x4, offset = 0x4, fixed_abs, tag = 'smem constant byte address 0x4 - core index']
  #allocation1 [shape = 'u32[144,128]{1,0:T(1,128)}', space=vmem, size = 0x12000, scoped, tag = 'internal scratch']
  #allocation2 [shape = 'f32[16,96]{1,0:T(8,128)}', space=vmem, size = 0x2000, scoped, tag = 'scratch operand']
  %s0 = inlined_call_operand.hbm [shape: bf16[16,32], index: 0, kind: input, shape index: {}]
  %s1 = inlined_call_operand.hbm [shape: bf16[32,96], index: 1, kind: input, shape index: {}]
  %s2 = inlined_call_operand.vmem [shape: f32[1,96], index: 2, kind: input, shape index: {}]
  %s3 = inlined_call_operand.hbm [shape: bf16[16,96], index: 3, kind: output, shape index: {}]
  %s4 = sld [smem:[#allocation0]]
  $region38: #{tpu_custom_call.1} parent=0
    _
  %s6 = ssub.s32 1, %s4
  %s7 = scalar_select 0, %s6, %s4
  $region1: #{tpu_custom_call.1} parent=0
    #allocation3 [shape = 'u8[4096]{0}', space=vmem, size = 0x1000, scoped, tag = 'input window, operand 0, single buffered']
    #allocation4 [shape = 's32[1]{0}', space=sflag, size = 0x4, scoped, tag = 'scoped memory for tpu_custom_call.1']
    #allocation5 [shape = 's32[1]{0}', space=sflag, size = 0x4, scoped, tag = 'scoped memory for tpu_custom_call.1']
    #allocation6 [shape = 'u8[8192]{0}', space=vmem, size = 0x2000, scoped, tag = 'input window, operand 1, single buffered']
    #allocation7 [shape = 's32[1]{0}', space=sflag, size = 0x4, scoped, tag = 'scoped memory for tpu_custom_call.1']
    #allocation8 [shape = 'u8[4096]{0}', space=vmem, size = 0x1000, scoped, tag = 'output window, operand 0, single buffered']
    %8 = vsyncpa [#allocation4], 0
    %9 = vsyncpa [#allocation7], 0
    %10 = vsyncpa [#allocation5], 0
    // Predicated region
    $region2: #{tpu_custom_call.1} parent=1 // pred_check
      _
    $region3: #{tpu_custom_call.1} parent=1 // pred_check_branch
      %12 = sbr.rel (0) target = $region5
    $region4: #{tpu_custom_call.1} parent=1 // pred_region
      %s14 = ssub.s32 128, 128
      %15 = vsyncadd [#allocation4], %s14
      %s16 = sshll.u32 [#allocation3], 4
      %s17 = int_to_ptr.vmem [resolvable:$true] %s16
      %22 = dma.hbm_to_vmem [thread:$0]  %s0, 128, %s17, [#allocation4], 64, 64, 4
    $region5: #{tpu_custom_call.1} parent=1 // pred_fallthru
      _
    // Predicated region
    $region6: #{tpu_custom_call.1} parent=1 // pred_check
      _
    $region7: #{tpu_custom_call.1} parent=1 // pred_check_branch
      %24 = sbr.rel (0) target = $region9
    $region8: #{tpu_custom_call.1} parent=1 // pred_region
      %s26 = ssub.s32 256, 256
      %27 = vsyncadd [#allocation7], %s26
      %s28 = sshll.u32 [#allocation6], 4
      %s29 = int_to_ptr.vmem [resolvable:$true] %s28
      %34 = dma.hbm_to_vmem [thread:$0]  %s1, 256, %s29, [#allocation7], 64, 64, 4
    $region9: #{tpu_custom_call.1} parent=1 // pred_fallthru
      _
    // Predicated region
    $region10: #{tpu_custom_call.1} parent=1 // pred_check
      _
    $region11: #{tpu_custom_call.1} parent=1 // pred_check_branch
      %36 = sbr.rel (0) target = $region13
    $region12: #{tpu_custom_call.1} parent=1 // pred_region
      _
    $region13: #{tpu_custom_call.1} parent=1 // pred_fallthru
      _
    // Predicated region
    $region14: #{tpu_custom_call.1} parent=1 // pred_check
      _
    $region15: #{tpu_custom_call.1} parent=1 // pred_check_branch
      %38 = sbr.rel (0) target = $region17
    $region16: #{tpu_custom_call.1} parent=1 // pred_region
      %39 = dma.done [#allocation4], 128
    $region17: #{tpu_custom_call.1} parent=1 // pred_fallthru
      _
    // Predicated region
    $region18: #{tpu_custom_call.1} parent=1 // pred_check
      _
    $region19: #{tpu_custom_call.1} parent=1 // pred_check_branch
      %41 = sbr.rel (0) target = $region21
    $region20: #{tpu_custom_call.1} parent=1 // pred_region
      %42 = dma.done [#allocation7], 256
    $region21: #{tpu_custom_call.1} parent=1 // pred_fallthru
      _
    %p44 = scmp.eq.s32.totalorder 0, 0
    // Predicated region
    $region22: #{tpu_custom_call.1} parent=1 // pred_check
      %p45 = pneg %p44
    $region23: #{tpu_custom_call.1} parent=1 // pred_check_branch
      %47 = sbr.rel (%p45) target = $region25
    $region24: #{tpu_custom_call.1} parent=1 // pred_region
      %vm48 = vcmask 785408
      %49 = vst.msk [vmem:[#allocation2] sm:$0xff] %vm48, 0.0
      %50 = vst.msk [vmem:[#allocation2 + $0x8] sm:$0xff] %vm48, 0.0
    $region25: #{tpu_custom_call.1} parent=1 // pred_fallthru
      _
    %v51 = vld [vmem:[#allocation2] sm:$0xff]
    %v52 = vld [vmem:[#allocation2 + $0x8] sm:$0xff]
    %v53 = vld [vmem:[#allocation3] sm:$0xf]
    %v54 = vld [vmem:[#allocation3 + $0x4] sm:$0xf]
    %v55 = vld [vmem:[#allocation6] sm:$0xf]
    %v56 = vld [vmem:[#allocation6 + $0x4] sm:$0xf]
    %v57 = vld [vmem:[#allocation6 + $0x8] sm:$0xf]
    %v58 = vld [vmem:[#allocation6 + $0xc] sm:$0xf]
    %v61 = vunpack.c.l.b16 %v53
    %v62 = vunpack.c.l.b16 %v54
    %v63 = vpack.c.b16 %v62, %v61
    %v68 = vunpack.c.l.b16 %v55
    %v69 = vunpack.c.l.b16 %v56
    %v70 = vunpack.c.l.b16 %v57
    %v71 = vunpack.c.l.b16 %v58
    %v72 = vpack.c.b16 %v69, %v68
    %v73 = vpack.c.b16 %v71, %v70
    %vm76 = vcmask 261120
    %v78 = vsel %vm76, %v63, 0
    %80 = vmatprep.subr.bf16.mxu0 0
    %81 = vmatpush1.bf16.msra.mxu0 0
    %82 = vmatprep.subr.bf16.mxu0 0
    %83 = vmatpush1.bf16.msra.mxu0 0
    %84 = vmatprep.subr.bf16.mxu0 0
    %85 = vmatpush1.bf16.msra.mxu0 0
    %86 = vmatprep.subr.bf16.mxu0 0
    %87 = vmatpush1.bf16.msra.mxu0 0
    %88 = vmatprep.subr.bf16.mxu0 0
    %89 = vmatpush1.bf16.msra.mxu0 0
    %90 = vmatprep.subr.bf16.mxu0 0
    %91 = vmatpush1.bf16.msra.mxu0 0
    %92 = vmatprep.subr.bf16.mxu0 0
    %93 = vmatpush1.bf16.msra.mxu0 %v73
    %94 = vmatprep.subr.bf16.mxu0 0
    %95 = vmatpush1.bf16.msra.mxu0 %v72
    %96 = vmatprep.subr.bf16.mxu0 0
    %97 = vmatpush2.bf16.msra.mxu0 0
    %98 = vmatprep.subr.bf16.mxu0 0
    %99 = vmatpush2.bf16.msra.mxu0 0
    %100 = vmatprep.subr.bf16.mxu0 0
    %101 = vmatpush2.bf16.msra.mxu0 0
    %102 = vmatprep.subr.bf16.mxu0 0
    %103 = vmatpush2.bf16.msra.mxu0 0
    %104 = vmatprep.subr.bf16.mxu0 0
    %105 = vmatpush2.bf16.msra.mxu0 0
    %106 = vmatprep.subr.bf16.mxu0 0
    %107 = vmatpush2.bf16.msra.mxu0 0
    %108 = vmatprep.subr.bf16.mxu0 0
    %109 = vmatpush2.bf16.msra.mxu0 0
    %110 = vmatprep.subr.bf16.mxu0 0
    %111 = vmatpush2.bf16.msra.mxu0 0
    %112 = vmatprep.mubr.bf16.mxu0 0
    %113 = vmatmul.mubr.bf16.gmra.mxu0 %v78
    %v114 = vpop.f32.mrf.mxu0
    %v115 = vadd.f32 0.0, %v114
    %v116 = vpop.f32.mrf.mxu0
    %v117 = vpop.f32.mrf.mxu0
    %v118 = vadd.f32 0.0, %v117
    %v119 = vpop.f32.mrf.mxu0
    %120 = vdwg.mxu0
    %v121 = vadd.f32 %v51, %v115
    %v122 = vadd.f32 %v52, %v118
    %vm123 = vcmask 785408
    %124 = vst.msk [vmem:[#allocation2] sm:$0xff] %vm123, %v121
    %125 = vst.msk [vmem:[#allocation2 + $0x8] sm:$0xff] %vm123, %v122
    // Predicated region
    $region26: #{tpu_custom_call.1} parent=1 // pred_check
      %p126 = pneg %p44
    $region27: #{tpu_custom_call.1} parent=1 // pred_check_branch
      %128 = sbr.rel (%p126) target = $region29
    $region28: #{tpu_custom_call.1} parent=1 // pred_region
      %v129 = vld [vmem:[#allocation2] sm:$0xff]
      %v130 = vld [vmem:[#allocation2 + $0x8] sm:$0xff]
      %v131 = vld [vmem:[%s2] sm:$0x1]
      %v133 = vlaneseq
      %v134 = vshrl.u32 %v133, 7
      %v135 = vsub.s32 0, %v134
      %v136 = vrot.slane %v131, %v135
      %v138 = vadd.f32 %v129, %v136
      %v139 = vadd.f32 %v130, %v136
      %v140 = vpack.c.bf16 %v139, %v138
      %v142 = vunpack.c.l.b16 %v140
      %v143 = vunpack.c.h.b16 %v140
      %v144 = vpack.c.b16 %v142, %v142
      %v145 = vpack.c.b16 %v143, %v143
      %vm148 = vcmask 781312
      %149 = vst.msk [vmem:[#allocation8] sm:$0xf] %vm148, %v144
      %150 = vst.msk [vmem:[#allocation8 + $0x4] sm:$0xf] %vm148, %v145
    $region29: #{tpu_custom_call.1} parent=1 // pred_fallthru
      _
    // Predicated region
    $region30: #{tpu_custom_call.1} parent=1 // pred_check
      _
    $region31: #{tpu_custom_call.1} parent=1 // pred_check_branch
      %152 = sbr.rel (0) target = $region33
    $region32: #{tpu_custom_call.1} parent=1 // pred_region
      %s154 = ssub.s32 128, 128
      %155 = vsyncadd [#allocation5], %s154
      %s156 = sshll.u32 [#allocation8], 4
      %s157 = int_to_ptr.vmem [resolvable:$true] %s156
      %162 = dma.vmem_to_hbm [thread:$0]  %s157, 128, %s3, [#allocation5], 64, 64, 4
    $region33: #{tpu_custom_call.1} parent=1 // pred_fallthru
      _
    // Predicated region
    $region34: #{tpu_custom_call.1} parent=1 // pred_check
      _
    $region35: #{tpu_custom_call.1} parent=1 // pred_check_branch
      %164 = sbr.rel (0) target = $region37
    $region36: #{tpu_custom_call.1} parent=1 // pred_region
      %165 = dma.done [#allocation5], 128
    $region37: #{tpu_custom_call.1} parent=1 // pred_fallthru
      _
    %166 = vsyncpa [#allocation4], 1
    %167 = vsyncpa [#allocation7], 1
    %168 = vsyncpa [#allocation5], 1

</llo_original>
